<compile_context>
chip_gen: v5e
topology: v5e:2x2
jax: 0.10.0
libtpu: 0.0.40
codegen_flags: <defaults>
</compile_context>

<pallas_src>
import math
import functools

import jax
import jax.numpy as jnp
from jax import lax
from jax.experimental import pallas as pl
from jax.experimental.pallas import tpu as pltpu


_LANE = 128
_SUBLANE = 8


def _round_up(x, m):
    return (x + m - 1) // m * m


def _vmem_capacity_bytes():
    """Per-core VMEM capacity (128 MiB on v5e/v6e, 64 MiB on v7x)."""
    try:
        return int(pltpu.get_tpu_info().vmem_capacity_bytes)
    except Exception:
        return 64 << 20   # conservative fallback: assume v7x-class per-core VMEM


# ---------------------------------------------------------------------------
# Path A: one-hot MXU gather (small/medium tables, VMEM-resident, transposed).
# ---------------------------------------------------------------------------
def _make_onehot_kernel(tile_b, with_emb):
    def kernel(uid_ref, iid_ref, wt_ref, ht_ref, *out_refs):
        # uid_ref/iid_ref : VMEM (1, tile_b) int32 (lane-dense index block)
        # wt_ref          : VMEM (K, u_pad) f32   (full table, single copy)
        # ht_ref          : VMEM (K, i_pad) f32
        if with_emb:
            out_ref, uembt_ref, vembt_ref = out_refs
        else:
            (out_ref,) = out_refs

        u_rows = wt_ref.shape[1]
        i_rows = ht_ref.shape[1]
        uid = uid_ref[...]                                   # (1, tile_b)
        iid = iid_ref[...]

        # One-hot^T built on the VPU.  f32 keeps the row selection exact on
        # every generation (v5e has no bf16 VALU).  Rows sit on the sublane
        # axis so the MXU product comes out lane-dense in the batch.
        onehot_u = (lax.broadcasted_iota(jnp.int32, (u_rows, tile_b), 0)
                    == uid).astype(jnp.float32)              # (u_rows, tile_b)
        onehot_v = (lax.broadcasted_iota(jnp.int32, (i_rows, tile_b), 0)
                    == iid).astype(jnp.float32)              # (i_rows, tile_b)

        # (K, rows) @ (rows, tile_b) -> (K, tile_b): embeddings, batch on lanes.
        u_embt = jnp.dot(wt_ref[...], onehot_u,
                         preferred_element_type=jnp.float32)
        v_embt = jnp.dot(ht_ref[...], onehot_v,
                         preferred_element_type=jnp.float32)

        prod = u_embt * v_embt                               # (K, tile_b)
        out_ref[...] = jnp.sum(prod, axis=0, keepdims=True)  # (1, tile_b) lane-dense

        if with_emb:
            uembt_ref[...] = u_embt                          # lane-dense stores
            vembt_ref[...] = v_embt

    return kernel


# ---------------------------------------------------------------------------
# Path B: scalar-prefetch row gather (fallback for tables too large for the
# one-hot path).  Inference fuses the U*V product into the gather loop so it
# issues one store per row instead of two (the loop is vst-slot bound).
# ---------------------------------------------------------------------------
def _make_gather_kernel(tile_b, with_emb):
    def kernel(uid_ref, iid_ref, w_ref, h_ref, *refs):
        # uid_ref/iid_ref : SMEM (B_pad,) int32  (scalar-prefetched)
        # w_ref/h_ref     : VMEM (rows, K) f32   (full table, single copy)
        if with_emb:
            out_ref, uemb_ref, vemb_ref, u_buf, v_buf = refs
        else:
            out_ref, prod_buf = refs

        base = pl.program_id(0) * tile_b

        if with_emb:
            def body(r, carry):
                u = uid_ref[base + r]
                v = iid_ref[base + r]
                u_buf[pl.ds(r, 1), :] = w_ref[pl.ds(u, 1), :]
                v_buf[pl.ds(r, 1), :] = h_ref[pl.ds(v, 1), :]
                return carry

            lax.fori_loop(0, tile_b, body, 0, unroll=16)
            u_emb = u_buf[...]
            v_emb = v_buf[...]
            out_ref[...] = jnp.reshape(jnp.sum(u_emb * v_emb, axis=1),
                                       (1, tile_b))
            # TODO(synk): fallback-path training outputs stay (B_pad, K); a
            # lane-dense (K, B_pad) store would need an in-kernel transpose.
            uemb_ref[...] = u_emb
            vemb_ref[...] = v_emb
        else:
            def body(r, carry):
                u = uid_ref[base + r]
                v = iid_ref[base + r]
                # Fused gather+multiply: one (1, K) store per row.
                prod_buf[pl.ds(r, 1), :] = (w_ref[pl.ds(u, 1), :] *
                                            h_ref[pl.ds(v, 1), :])
                return carry

            lax.fori_loop(0, tile_b, body, 0, unroll=16)
            out_ref[...] = jnp.reshape(jnp.sum(prod_buf[...], axis=1),
                                       (1, tile_b))

    return kernel


@functools.partial(jax.jit,
                   static_argnames=("is_training", "tile_b", "force_gather"))
def mf_forward_pallas(x, W, H, is_training=False, tile_b=256,
                      force_gather=False):
    """Pallas forward for MF_BaseModel.

    Returns `out` (B,), or (out, U_emb, V_emb) when is_training=True.
    """
    B = x.shape[0]
    num_users, K = W.shape
    num_items, _ = H.shape

    n_tiles = pl.cdiv(B, tile_b)
    B_pad = n_tiles * tile_b

    # PyTorch's nn.Embedding raises on out-of-range indices; clamp so the
    # in-kernel gather never reads out of bounds.
    uid = jnp.clip(x[:, 0].astype(jnp.int32), 0, num_users - 1)
    iid = jnp.clip(x[:, 1].astype(jnp.int32), 0, num_items - 1)
    uid = jnp.pad(uid, (0, B_pad - B))
    iid = jnp.pad(iid, (0, B_pad - B))

    # ---- VMEM budget from (8,128)-padded shapes, generation-aware cap ----
    cap = int(0.85 * _vmem_capacity_bytes())   # ~54 MiB v7x, ~109 MiB v5e/v6e
    u_pad = _round_up(num_users, _LANE)
    i_pad = _round_up(num_items, _LANE)
    k_sub = _round_up(K, _SUBLANE)
    k_lane = _round_up(K, _LANE)

    # Path A: single-buffered transposed tables + one-hot temporaries +
    # double-buffered (1, tile_b) / (K, tile_b) blocks.
    need_a = (k_sub * (u_pad + i_pad) * 4
              + (u_pad + i_pad) * tile_b * 4
              + (3 + (4 if is_training else 0)) * 2 * _SUBLANE * tile_b * 4
              + (4 << 20))
    # Path B: (rows, K) tables lane-pad K -> 128 (32x amplification) + gather
    # scratch + output blocks.
    need_b = ((_round_up(num_users, _SUBLANE) + _round_up(num_items, _SUBLANE))
              * k_lane * 4
              + (2 if is_training else 1) * tile_b * k_lane * 4
              + 2 * _SUBLANE * tile_b * 4
              + (4 if is_training else 0) * tile_b * k_lane * 4
              + (2 << 20))

    use_onehot = ((not force_gather)
                  and (u_pad + i_pad) <= 8192   # keep one-hot temporaries small
                  and need_a <= cap)

    if use_onehot:
        # ---------------- Path A: one-hot MXU gather ----------------
        WT = jnp.pad(W.T, ((0, 0), (0, u_pad - num_users)))   # (K, u_pad)
        HT = jnp.pad(H.T, ((0, 0), (0, i_pad - num_items)))   # (K, i_pad)
        uid2d = uid.reshape(1, B_pad)
        iid2d = iid.reshape(1, B_pad)

        out_shapes = [jax.ShapeDtypeStruct((1, B_pad), jnp.float32)]
        out_specs = [pl.BlockSpec((1, tile_b), lambda i: (0, i))]
        if is_training:
            out_shapes += [jax.ShapeDtypeStruct((K, B_pad), jnp.float32),
                           jax.ShapeDtypeStruct((K, B_pad), jnp.float32)]
            out_specs += [pl.BlockSpec((K, tile_b), lambda i: (0, i)),
                          pl.BlockSpec((K, tile_b), lambda i: (0, i))]

        results = pl.pallas_call(
            _make_onehot_kernel(tile_b, is_training),
            out_shape=tuple(out_shapes),
            grid=(n_tiles,),
            in_specs=[
                pl.BlockSpec((1, tile_b), lambda i: (0, i)),          # uid
                pl.BlockSpec((1, tile_b), lambda i: (0, i)),          # iid
                # Grid-invariant tables: whole array resident in VMEM once
                # (single copy, never re-fetched, not double-buffered).
                pl.BlockSpec(memory_space=pltpu.MemorySpace.VMEM),    # W^T
                pl.BlockSpec(memory_space=pltpu.MemorySpace.VMEM),    # H^T
            ],
            out_specs=tuple(out_specs),
            compiler_params=pltpu.CompilerParams(
                dimension_semantics=("parallel",),   # v7x: 2 TCs split tiles
                vmem_limit_bytes=int(min(max(need_a, 16 << 20), cap)),
            ),
        )(uid2d, iid2d, WT, HT)

        out = results[0][0, :B]
        if is_training:
            return out, results[1][:, :B].T, results[2][:, :B].T
        return out

    # ---------------- Path B: scalar-prefetch row gather ----------------
    # TODO(synk): for tables whose padded footprint exceeds the VMEM cap,
    # switch W/H to memory_space=pl.ANY and DMA-gather rows into a
    # double-buffered scratch instead of keeping the whole table resident.
    out_shapes = [jax.ShapeDtypeStruct((1, B_pad), jnp.float32)]
    out_specs = [pl.BlockSpec((1, tile_b), lambda i, u_r, v_r: (0, i))]
    if is_training:
        out_shapes += [jax.ShapeDtypeStruct((B_pad, K), jnp.float32),
                       jax.ShapeDtypeStruct((B_pad, K), jnp.float32)]
        out_specs += [pl.BlockSpec((tile_b, K), lambda i, u_r, v_r: (i, 0)),
                      pl.BlockSpec((tile_b, K), lambda i, u_r, v_r: (i, 0))]
        scratch = [pltpu.VMEM((tile_b, K), jnp.float32),
                   pltpu.VMEM((tile_b, K), jnp.float32)]
    else:
        scratch = [pltpu.VMEM((tile_b, K), jnp.float32)]   # fused U*V buffer

    results = pl.pallas_call(
        _make_gather_kernel(tile_b, is_training),
        out_shape=tuple(out_shapes),
        grid_spec=pltpu.PrefetchScalarGridSpec(
            num_scalar_prefetch=2,            # uid, iid -> SMEM
            grid=(n_tiles,),
            in_specs=[
                pl.BlockSpec(memory_space=pltpu.MemorySpace.VMEM),    # W
                pl.BlockSpec(memory_space=pltpu.MemorySpace.VMEM),    # H
            ],
            out_specs=tuple(out_specs),
            scratch_shapes=scratch,
        ),
        compiler_params=pltpu.CompilerParams(
            dimension_semantics=("parallel",),
            vmem_limit_bytes=int(min(max(need_b, 16 << 20), cap)),
        ),
    )(uid, iid, W, H)

    out = results[0][0, :B]
    if is_training:
        return out, results[1][:B], results[2][:B]
    return out


def init_params(key, num_users, num_items, embedding_k):
    """xavier_normal_ init: std = sqrt(2 / (fan_in + fan_out))."""
    kw, kh = jax.random.split(key)
    std_w = math.sqrt(2.0 / (num_users + embedding_k))
    std_h = math.sqrt(2.0 / (num_items + embedding_k))
    W = std_w * jax.random.normal(kw, (num_users, embedding_k), jnp.float32)
    H = std_h * jax.random.normal(kh, (num_items, embedding_k), jnp.float32)
    return W, H


if __name__ == "__main__":
    # TODO(synk): self.sigmoid / self.xent_func (BCELoss) are defined in
    # __init__ but unused in forward(); not implemented here.
    num_users, num_items, embedding_k = 300, 500, 4
    B = 300   # NOT a multiple of tile_b=256: exercises padding and a 2-tile grid.

    key = jax.random.PRNGKey(0)
    k_param, k_u, k_i = jax.random.split(key, 3)
    W, H = init_params(k_param, num_users, num_items, embedding_k)

    user_idx = jax.random.randint(k_u, (B,), 0, num_users, dtype=jnp.int32)
    item_idx = jax.random.randint(k_i, (B,), 0, num_items, dtype=jnp.int32)
    x = jnp.stack([user_idx, item_idx], axis=1)   # (B, 2) int32

    # Plain-JAX reference.
    u_ref = W[user_idx]
    v_ref = H[item_idx]
    out_ref = jnp.sum(u_ref * v_ref, axis=1)

    # Primary (one-hot MXU) path: inference and training variants.
    out = jax.block_until_ready(mf_forward_pallas(x, W, H))
    out_t, u_emb, v_emb = jax.block_until_ready(
        mf_forward_pallas(x, W, H, is_training=True))

    assert out.shape == (B,)
    assert u_emb.shape == (B, embedding_k) and v_emb.shape == (B, embedding_k)
    assert jnp.allclose(out, out_ref, atol=1e-5, rtol=1e-5)
    assert jnp.allclose(out_t, out_ref, atol=1e-5, rtol=1e-5)
    assert jnp.allclose(u_emb, u_ref, atol=1e-6, rtol=1e-6)
    assert jnp.allclose(v_emb, v_ref, atol=1e-6, rtol=1e-6)

    # Large-table fallback (scalar-prefetch gather), forced for coverage.
    out_g = jax.block_until_ready(
        mf_forward_pallas(x, W, H, force_gather=True))
    out_gt, u_g, v_g = jax.block_until_ready(
        mf_forward_pallas(x, W, H, is_training=True, force_gather=True))

    assert jnp.allclose(out_g, out_ref, atol=1e-5, rtol=1e-5)
    assert jnp.allclose(out_gt, out_ref, atol=1e-5, rtol=1e-5)
    assert jnp.allclose(u_g, u_ref, atol=1e-6, rtol=1e-6)
    assert jnp.allclose(v_g, v_ref, atol=1e-6, rtol=1e-6)

    print("KERNEL_OK")
</pallas_src>

<mosaic_0001>
module attributes {stable_mosaic.version = 11 : i64} {
  func.func @kernel(%arg0: i32, %arg1: memref<1x256xi32, #tpu.memory_space<vmem>>, %arg2: memref<1x256xi32, #tpu.memory_space<vmem>>, %arg3: memref<4x384xf32, #tpu.memory_space<vmem>>, %arg4: memref<4x512xf32, #tpu.memory_space<vmem>>, %arg5: memref<1x256xf32, #tpu.memory_space<vmem>>) attributes {dimension_semantics = [#tpu.dimension_semantics<parallel>], iteration_bounds = array<i64: 2>, scalar_prefetch = 0 : i64, scratch_operands = 0 : i64, tpu.core_type = #tpu.core_type<tc>, window_params = [{transform_indices = @transform_0, window_bounds = array<i64: 1, 256>}, {transform_indices = @transform_1, window_bounds = array<i64: 1, 256>}, {pipeline_mode = #tpu.pipeline_mode<synchronous>, transform_indices = @transform_2, window_bounds = array<i64: 4, 384>}, {pipeline_mode = #tpu.pipeline_mode<synchronous>, transform_indices = @transform_3, window_bounds = array<i64: 4, 512>}, {transform_indices = @transform_4, window_bounds = array<i64: 1, 256>}]} {
    %c0 = arith.constant 0 : index
    %c0_0 = arith.constant 0 : index
    %0 = vector.load %arg1[%c0, %c0_0] : memref<1x256xi32, #tpu.memory_space<vmem>>, vector<1x256xi32>
    %c0_1 = arith.constant 0 : index
    %c0_2 = arith.constant 0 : index
    %1 = vector.load %arg2[%c0_1, %c0_2] : memref<1x256xi32, #tpu.memory_space<vmem>>, vector<1x256xi32>
    %2 = tpu.iota {dimensions = array<i32: 0>} : vector<384x256xi32>
    %3 = vector.broadcast %0 : vector<1x256xi32> to vector<384x256xi32>
    %4 = arith.cmpi eq, %2, %3 : vector<384x256xi32>
    %5 = arith.extui %4 : vector<384x256xi1> to vector<384x256xi32>
    %6 = arith.sitofp %5 : vector<384x256xi32> to vector<384x256xf32>
    %7 = tpu.iota {dimensions = array<i32: 0>} : vector<512x256xi32>
    %8 = vector.broadcast %1 : vector<1x256xi32> to vector<512x256xi32>
    %9 = arith.cmpi eq, %7, %8 : vector<512x256xi32>
    %10 = arith.extui %9 : vector<512x256xi1> to vector<512x256xi32>
    %11 = arith.sitofp %10 : vector<512x256xi32> to vector<512x256xf32>
    %c0_3 = arith.constant 0 : index
    %c0_4 = arith.constant 0 : index
    %12 = vector.load %arg3[%c0_3, %c0_4] : memref<4x384xf32, #tpu.memory_space<vmem>>, vector<4x384xf32>
    %cst = arith.constant dense<0.000000e+00> : vector<4x256xf32>
    %13 = tpu.matmul %12, %6, %cst {dimension_numbers = #tpu.dot_dimension_numbers<[1], [0], [0], [1], [0, 0, 1, 1], [], []>} : vector<4x384xf32>, vector<384x256xf32>, vector<4x256xf32> -> vector<4x256xf32>
    %c0_5 = arith.constant 0 : index
    %c0_6 = arith.constant 0 : index
    %14 = vector.load %arg4[%c0_5, %c0_6] : memref<4x512xf32, #tpu.memory_space<vmem>>, vector<4x512xf32>
    %cst_7 = arith.constant dense<0.000000e+00> : vector<4x256xf32>
    %15 = tpu.matmul %14, %11, %cst_7 {dimension_numbers = #tpu.dot_dimension_numbers<[1], [0], [0], [1], [0, 0, 1, 1], [], []>} : vector<4x512xf32>, vector<512x256xf32>, vector<4x256xf32> -> vector<4x256xf32>
    %16 = arith.mulf %13, %15 : vector<4x256xf32>
    %cst_8 = arith.constant dense<0.000000e+00> : vector<256xf32>
    %17 = vector.multi_reduction <add>, %16, %cst_8 [0] : vector<4x256xf32> to vector<256xf32>
    %18 = vector.shape_cast %17 : vector<256xf32> to vector<1x256xf32>
    %c0_9 = arith.constant 0 : index
    %c0_10 = arith.constant 0 : index
    %19 = vector.load %arg5[%c0_9, %c0_10] : memref<1x256xf32, #tpu.memory_space<vmem>>, vector<1x256xf32>
    tpu.vector_store %arg5[%c0_9, %c0_10], %18 {strides = array<i32>} : memref<1x256xf32, #tpu.memory_space<vmem>>, vector<1x256xf32>,
    return
  }
  func.func @transform_0(%arg0: i32) -> (i32, i32) {
    %c0_i32 = arith.constant 0 : i32
    %c0_i32_0 = arith.constant 0 : i32
    return %c0_i32, %arg0 : i32, i32
  }
  func.func @transform_1(%arg0: i32) -> (i32, i32) {
    %c0_i32 = arith.constant 0 : i32
    %c0_i32_0 = arith.constant 0 : i32
    return %c0_i32, %arg0 : i32, i32
  }
  func.func @transform_2(%arg0: i32) -> (i32, i32) {
    %c0_i32 = arith.constant 0 : i32
    %c0_i32_0 = arith.constant 0 : i32
    %c0_i32_1 = arith.constant 0 : i32
    return %c0_i32, %c0_i32_0 : i32, i32
  }
  func.func @transform_3(%arg0: i32) -> (i32, i32) {
    %c0_i32 = arith.constant 0 : i32
    %c0_i32_0 = arith.constant 0 : i32
    %c0_i32_1 = arith.constant 0 : i32
    return %c0_i32, %c0_i32_0 : i32, i32
  }
  func.func @transform_4(%arg0: i32) -> (i32, i32) {
    %c0_i32 = arith.constant 0 : i32
    %c0_i32_0 = arith.constant 0 : i32
    return %c0_i32, %arg0 : i32, i32
  }
}

</mosaic_0001>

<llo_original>
// kernel: mf_forward_pallas.1
$region0: #{mf_forward_pallas.1}
  #allocation0 [shape = 'u32[]', space=smem, size = 0x4, offset = 0x4, fixed_abs, tag = 'smem constant byte address 0x4 - core index']
  #allocation1 [shape = 'u32[72,128]{1,0:T(1,128)}', space=vmem, size = 0x9000, scoped, tag = 'internal scratch']
  %s0 = inlined_call_operand.vmem [shape: s32[1,512], index: 0, kind: input, shape index: {}]
  %s1 = inlined_call_operand.vmem [shape: s32[1,512], index: 1, kind: input, shape index: {}]
  %s2 = inlined_call_operand.vmem [shape: f32[4,384], index: 2, kind: input, shape index: {}]
  %s3 = inlined_call_operand.vmem [shape: f32[4,512], index: 3, kind: input, shape index: {}]
  %s4 = inlined_call_operand.vmem [shape: f32[1,512], index: 4, kind: output, shape index: {}]
  %s5 = sld [smem:[#allocation0]]
  $region49: #{mf_forward_pallas.1} parent=0
    _
  %s7 = ssub.s32 1, %s5
  %s8 = scalar_select 0, %s7, %s5
  loop: start=0, step=1, limit=4
  $region2: #{mf_forward_pallas.1} parent=0 // loop_pre_header
    _
  $region3: #{mf_forward_pallas.1} parent=0 // loop_header
    %s10 = sphi 0, %s14
    %p11 = scmp.ge.s32.totalorder %s10, 4
    %s20 = sphi 0, %s22
    %s23 = sphi 0, %s20
    %s24 = sphi 0, %s23
    %s40 = sphi 0, %s24
    %s46 = sphi 0, %s48
    %s49 = sphi 0, %s46
    %s50 = sphi 0, %s49
    %s66 = sphi 0, %s50
    %s70 = sphi 0, %s70
    %s72 = sphi 0, %s70
    %s73 = sphi 0, %s72
    %s87 = sphi 0, %s73
    %s91 = sphi 0, %s91
    %s93 = sphi 0, %s91
    %s94 = sphi 0, %s93
    %s108 = sphi 0, %s94
    %s114 = sphi 0, %s116
    %s117 = sphi 0, %s114
    %s118 = sphi 0, %s117
    %s134 = sphi 0, %s118
  $region4: #{mf_forward_pallas.1} parent=0 // loop_header_branch
    %13 = sbr.rel (%p11) target = $region8
  $region5: #{mf_forward_pallas.1} parent=0 // loop_body
    %s15 = ssub.s32 %s10, 1
    %s16 = ssub.s32 %s10, 2
    %s17 = sadd.s32 %s10, 1
    %s18 = ssub.s32 %s10, %s17
    %p19 = scmp.eq.s32.totalorder %s18, 0
    %s21 = sadd.s32 %s20, 1
    %s22 = scalar_select %p19, %s20, %s21
    %p25 = pneg %p19
    %p26 = scmp.eq.s32.totalorder %s10, 1
    %p27 = por %p25, %p26
    %p28 = scmp.ne.s32.totalorder %s20, %s23
    %p29 = scmp.eq.s32.totalorder %s10, 0
    %p30 = por %p28, %p29
    %p31 = scmp.ne.s32.totalorder %s20, %s23
    %p32 = scmp.eq.s32.totalorder %s15, 1
    %p33 = por %p31, %p32
    %p34 = scmp.ne.s32.totalorder %s23, %s24
    %p35 = scmp.eq.s32.totalorder %s15, 0
    %p36 = por %p34, %p35
    %p37 = scmp.ne.s32.totalorder %s23, %s24
    %p38 = scmp.eq.s32.totalorder %s16, 1
    %p39 = por %p37, %p38
    %p41 = scmp.ne.s32.totalorder %s24, %s40
    %p42 = scmp.eq.s32.totalorder %s16, 0
    %p43 = por %p41, %p42
    %s44 = ssub.s32 %s10, %s17
    %p45 = scmp.eq.s32.totalorder %s44, 0
    %s47 = sadd.s32 %s46, 1
    %s48 = scalar_select %p45, %s46, %s47
    %p51 = pneg %p45
    %p52 = scmp.eq.s32.totalorder %s10, 1
    %p53 = por %p51, %p52
    %p54 = scmp.ne.s32.totalorder %s46, %s49
    %p55 = scmp.eq.s32.totalorder %s10, 0
    %p56 = por %p54, %p55
    %p57 = scmp.ne.s32.totalorder %s46, %s49
    %p58 = scmp.eq.s32.totalorder %s15, 1
    %p59 = por %p57, %p58
    %p60 = scmp.ne.s32.totalorder %s49, %s50
    %p61 = scmp.eq.s32.totalorder %s15, 0
    %p62 = por %p60, %p61
    %p63 = scmp.ne.s32.totalorder %s49, %s50
    %p64 = scmp.eq.s32.totalorder %s16, 1
    %p65 = por %p63, %p64
    %p67 = scmp.ne.s32.totalorder %s50, %s66
    %p68 = scmp.eq.s32.totalorder %s16, 0
    %p69 = por %p67, %p68
    %s71 = sadd.s32 %s70, 1
    %p74 = scmp.eq.s32.totalorder %s10, 1
    %p75 = scmp.ne.s32.totalorder %s70, %s72
    %p76 = scmp.eq.s32.totalorder %s10, 0
    %p77 = por %p75, %p76
    %p78 = scmp.ne.s32.totalorder %s70, %s72
    %p79 = scmp.eq.s32.totalorder %s15, 1
    %p80 = por %p78, %p79
    %p81 = scmp.ne.s32.totalorder %s72, %s73
    %p82 = scmp.eq.s32.totalorder %s15, 0
    %p83 = por %p81, %p82
    %p84 = scmp.ne.s32.totalorder %s72, %s73
    %p85 = scmp.eq.s32.totalorder %s16, 1
    %p86 = por %p84, %p85
    %p88 = scmp.ne.s32.totalorder %s73, %s87
    %p89 = scmp.eq.s32.totalorder %s16, 0
    %p90 = por %p88, %p89
    %s92 = sadd.s32 %s91, 1
    %p95 = scmp.eq.s32.totalorder %s10, 1
    %p96 = scmp.ne.s32.totalorder %s91, %s93
    %p97 = scmp.eq.s32.totalorder %s10, 0
    %p98 = por %p96, %p97
    %p99 = scmp.ne.s32.totalorder %s91, %s93
    %p100 = scmp.eq.s32.totalorder %s15, 1
    %p101 = por %p99, %p100
    %p102 = scmp.ne.s32.totalorder %s93, %s94
    %p103 = scmp.eq.s32.totalorder %s15, 0
    %p104 = por %p102, %p103
    %p105 = scmp.ne.s32.totalorder %s93, %s94
    %p106 = scmp.eq.s32.totalorder %s16, 1
    %p107 = por %p105, %p106
    %p109 = scmp.ne.s32.totalorder %s94, %s108
    %p110 = scmp.eq.s32.totalorder %s16, 0
    %p111 = por %p109, %p110
    %s112 = ssub.s32 %s10, %s17
    %p113 = scmp.eq.s32.totalorder %s112, 0
    %s115 = sadd.s32 %s114, 1
    %s116 = scalar_select %p113, %s114, %s115
    %p119 = pneg %p113
    %p120 = scmp.eq.s32.totalorder %s10, 1
    %p121 = por %p119, %p120
    %p122 = scmp.ne.s32.totalorder %s114, %s117
    %p123 = scmp.eq.s32.totalorder %s10, 0
    %p124 = por %p122, %p123
    %p125 = scmp.ne.s32.totalorder %s114, %s117
    %p126 = scmp.eq.s32.totalorder %s15, 1
    %p127 = por %p125, %p126
    %p128 = scmp.ne.s32.totalorder %s117, %s118
    %p129 = scmp.eq.s32.totalorder %s15, 0
    %p130 = por %p128, %p129
    %p131 = scmp.ne.s32.totalorder %s117, %s118
    %p132 = scmp.eq.s32.totalorder %s16, 1
    %p133 = por %p131, %p132
    %p135 = scmp.ne.s32.totalorder %s118, %s134
    %p136 = scmp.eq.s32.totalorder %s16, 0
    %p137 = por %p135, %p136
    %p138 = scmp.le.s32.totalorder 1, %s10
    %p139 = scmp.lt.s32.totalorder %s10, 3
    %p140 = pnand %p138, %p139
    %p141 = pneg %p140
    // Predicated region
    $region9: #{mf_forward_pallas.1} parent=5 // pred_check
      _
    $region10: #{mf_forward_pallas.1} parent=5 // pred_check_branch
      %143 = sbr.rel (%p140) target = $region12
    $region11: #{mf_forward_pallas.1} parent=5 // pred_region
      %s144 = ssub.s32 %s10, 1
      // Predicated region
      $region13: #{mf_forward_pallas.1} parent=11 // pred_check
        %p145 = pneg %p83
      $region14: #{mf_forward_pallas.1} parent=11 // pred_check_branch
        %147 = sbr.rel (%p145) target = $region16
      $region15: #{mf_forward_pallas.1} parent=11 // pred_region
        _
      $region16: #{mf_forward_pallas.1} parent=11 // pred_fallthru
        _
      // Predicated region
      $region17: #{mf_forward_pallas.1} parent=11 // pred_check
        %p148 = pneg %p104
      $region18: #{mf_forward_pallas.1} parent=11 // pred_check_branch
        %150 = sbr.rel (%p148) target = $region20
      $region19: #{mf_forward_pallas.1} parent=11 // pred_region
        _
      $region20: #{mf_forward_pallas.1} parent=11 // pred_fallthru
        _
    $region12: #{mf_forward_pallas.1} parent=5 // pred_fallthru
      _
    %p151 = scmp.lt.s32.totalorder %s10, 2
    // Predicated region
    $region21: #{mf_forward_pallas.1} parent=5 // pred_check
      %p152 = pneg %p151
    $region22: #{mf_forward_pallas.1} parent=5 // pred_check_branch
      %154 = sbr.rel (%p152) target = $region24
    $region23: #{mf_forward_pallas.1} parent=5 // pred_region
      // Predicated region
      $region25: #{mf_forward_pallas.1} parent=23 // pred_check
        %p155 = pneg %p30
      $region26: #{mf_forward_pallas.1} parent=23 // pred_check_branch
        %157 = sbr.rel (%p155) target = $region28
      $region27: #{mf_forward_pallas.1} parent=23 // pred_region
        %s158 = smul.u32 2, %s10
        %p159 = scmp.lt.s32.totalorder %s158, 3
        %s160 = scalar_select %p159, %s158, 3
        %s161 = scalar_lea.vmem %s0, %s160
        %s162 = smul.u32 2, %s10
      $region28: #{mf_forward_pallas.1} parent=23 // pred_fallthru
        _
      // Predicated region
      $region29: #{mf_forward_pallas.1} parent=23 // pred_check
        %p163 = pneg %p56
      $region30: #{mf_forward_pallas.1} parent=23 // pred_check_branch
        %165 = sbr.rel (%p163) target = $region32
      $region31: #{mf_forward_pallas.1} parent=23 // pred_region
        %s166 = smul.u32 2, %s10
        %p167 = scmp.lt.s32.totalorder %s166, 3
        %s168 = scalar_select %p167, %s166, 3
        %s169 = scalar_lea.vmem %s1, %s168
        %s170 = smul.u32 2, %s10
      $region32: #{mf_forward_pallas.1} parent=23 // pred_fallthru
        _
    $region24: #{mf_forward_pallas.1} parent=5 // pred_fallthru
      _
    %p171 = scmp.le.s32.totalorder 1, %s10
    %p172 = scmp.lt.s32.totalorder %s10, 3
    %p173 = pnand %p171, %p172
    %p174 = pneg %p173
    // Predicated region
    $region33: #{mf_forward_pallas.1} parent=5 // pred_check
      _
    $region34: #{mf_forward_pallas.1} parent=5 // pred_check_branch
      %176 = sbr.rel (%p173) target = $region36
    $region35: #{mf_forward_pallas.1} parent=5 // pred_region
      %s177 = ssub.s32 %s10, 1
      %s178 = smul.u32 2, %s15
      %p179 = scmp.lt.s32.totalorder %s178, 3
      %s180 = scalar_select %p179, %s178, 3
      %s181 = scalar_lea.vmem %s0, %s180
      %p182 = pneg %p36
      %p183 = pneg %p33
      %s184 = smul.u32 2, %s15
      %p185 = scmp.lt.s32.totalorder %s184, 3
      %s186 = scalar_select %p185, %s184, 3
      %s187 = scalar_lea.vmem %s1, %s186
      %p188 = pneg %p62
      %p189 = pneg %p59
      %p190 = pneg %p83
      %p191 = pneg %p80
      %p192 = pneg %p104
      %p193 = pneg %p101
      %p194 = pneg %p130
      %p195 = pneg %p127
      %s196 = smul.u32 2, %s15
      %p197 = scmp.lt.s32.totalorder %s196, 3
      %s198 = scalar_select %p197, %s196, 3
      %s199 = scalar_lea.vmem %s4, %s198
      %s200 = smul.u32 2, %s15
      %p201 = scmp.lt.s32.totalorder %s200, 3
      %s202 = scalar_select %p201, %s200, 3
      %s203 = scalar_lea.vmem %s0, %s202
      %s204 = smul.u32 2, %s15
      %s205 = smul.u32 2, %s15
      %p206 = scmp.lt.s32.totalorder %s205, 3
      %s207 = scalar_select %p206, %s205, 3
      %s208 = scalar_lea.vmem %s1, %s207
      %s209 = smul.u32 2, %s15
      %s210 = smul.u32 2, %s15
      %p211 = scmp.lt.s32.totalorder %s210, 3
      %s212 = scalar_select %p211, %s210, 3
      %s213 = scalar_lea.vmem %s4, %s212
      %s214 = smul.u32 2, %s15
      %v215 = vld [vmem:[%s203] sm:$0x3]
      %v216 = vld [vmem:[%s208] sm:$0x3]
      %v217 = vlaneseq
      %v218 = vshrl.u32 %v217, 7
      %v219 = vadd.s32 %v218, 8
      %v220 = vadd.s32 %v218, 16
      %v221 = vadd.s32 %v218, 24
      %v222 = vadd.s32 %v218, 32
      %v223 = vadd.s32 %v218, 40
      %v224 = vadd.s32 %v218, 48
      %v225 = vadd.s32 %v218, 56
      %v226 = vadd.s32 %v218, 64
      %v227 = vadd.s32 %v218, 72
      %v228 = vadd.s32 %v218, 80
      %v229 = vadd.s32 %v218, 88
      %v230 = vadd.s32 %v218, 96
      %v231 = vadd.s32 %v218, 104
      %v232 = vadd.s32 %v218, 112
      %v233 = vadd.s32 %v218, 120
      %v234 = vadd.s32 %v218, 128
      %v235 = vadd.s32 %v218, 136
      %v236 = vadd.s32 %v218, 144
      %v237 = vadd.s32 %v218, 152
      %v238 = vadd.s32 %v218, 160
      %v239 = vadd.s32 %v218, 168
      %v240 = vadd.s32 %v218, 176
      %v241 = vadd.s32 %v218, 184
      %v242 = vadd.s32 %v218, 192
      %v243 = vadd.s32 %v218, 200
      %v244 = vadd.s32 %v218, 208
      %v245 = vadd.s32 %v218, 216
      %v246 = vadd.s32 %v218, 224
      %v247 = vadd.s32 %v218, 232
      %v248 = vadd.s32 %v218, 240
      %v249 = vadd.s32 %v218, 248
      %v250 = vadd.s32 %v218, 256
      %v251 = vadd.s32 %v218, 264
      %v252 = vadd.s32 %v218, 272
      %v253 = vadd.s32 %v218, 280
      %v254 = vadd.s32 %v218, 288
      %v255 = vadd.s32 %v218, 296
      %v256 = vadd.s32 %v218, 304
      %v257 = vadd.s32 %v218, 312
      %v258 = vadd.s32 %v218, 320
      %v259 = vadd.s32 %v218, 328
      %v260 = vadd.s32 %v218, 336
      %v261 = vadd.s32 %v218, 344
      %v262 = vadd.s32 %v218, 352
      %v263 = vadd.s32 %v218, 360
      %v264 = vadd.s32 %v218, 368
      %v265 = vadd.s32 %v218, 376
      %v266 = vperm.slane %v215, 0
      %v267 = vperm.slane %v215, 1
      %vm268 = vcmp.eq.s32.totalorder %v218, %v266
      %vm269 = vcmp.eq.s32.totalorder %v218, %v267
      %vm270 = vcmp.eq.s32.totalorder %v219, %v266
      %vm271 = vcmp.eq.s32.totalorder %v219, %v267
      %vm272 = vcmp.eq.s32.totalorder %v220, %v266
      %vm273 = vcmp.eq.s32.totalorder %v220, %v267
      %vm274 = vcmp.eq.s32.totalorder %v221, %v266
      %vm275 = vcmp.eq.s32.totalorder %v221, %v267
      %vm276 = vcmp.eq.s32.totalorder %v222, %v266
      %vm277 = vcmp.eq.s32.totalorder %v222, %v267
      %vm278 = vcmp.eq.s32.totalorder %v223, %v266
      %vm279 = vcmp.eq.s32.totalorder %v223, %v267
      %vm280 = vcmp.eq.s32.totalorder %v224, %v266
      %vm281 = vcmp.eq.s32.totalorder %v224, %v267
      %vm282 = vcmp.eq.s32.totalorder %v225, %v266
      %vm283 = vcmp.eq.s32.totalorder %v225, %v267
      %vm284 = vcmp.eq.s32.totalorder %v226, %v266
      %vm285 = vcmp.eq.s32.totalorder %v226, %v267
      %vm286 = vcmp.eq.s32.totalorder %v227, %v266
      %vm287 = vcmp.eq.s32.totalorder %v227, %v267
      %vm288 = vcmp.eq.s32.totalorder %v228, %v266
      %vm289 = vcmp.eq.s32.totalorder %v228, %v267
      %vm290 = vcmp.eq.s32.totalorder %v229, %v266
      %vm291 = vcmp.eq.s32.totalorder %v229, %v267
      %vm292 = vcmp.eq.s32.totalorder %v230, %v266
      %vm293 = vcmp.eq.s32.totalorder %v230, %v267
      %vm294 = vcmp.eq.s32.totalorder %v231, %v266
      %vm295 = vcmp.eq.s32.totalorder %v231, %v267
      %vm296 = vcmp.eq.s32.totalorder %v232, %v266
      %vm297 = vcmp.eq.s32.totalorder %v232, %v267
      %vm298 = vcmp.eq.s32.totalorder %v233, %v266
      %vm299 = vcmp.eq.s32.totalorder %v233, %v267
      %vm300 = vcmp.eq.s32.totalorder %v234, %v266
      %vm301 = vcmp.eq.s32.totalorder %v234, %v267
      %vm302 = vcmp.eq.s32.totalorder %v235, %v266
      %vm303 = vcmp.eq.s32.totalorder %v235, %v267
      %vm304 = vcmp.eq.s32.totalorder %v236, %v266
      %vm305 = vcmp.eq.s32.totalorder %v236, %v267
      %vm306 = vcmp.eq.s32.totalorder %v237, %v266
      %vm307 = vcmp.eq.s32.totalorder %v237, %v267
      %vm308 = vcmp.eq.s32.totalorder %v238, %v266
      %vm309 = vcmp.eq.s32.totalorder %v238, %v267
      %vm310 = vcmp.eq.s32.totalorder %v239, %v266
      %vm311 = vcmp.eq.s32.totalorder %v239, %v267
      %vm312 = vcmp.eq.s32.totalorder %v240, %v266
      %vm313 = vcmp.eq.s32.totalorder %v240, %v267
      %vm314 = vcmp.eq.s32.totalorder %v241, %v266
      %vm315 = vcmp.eq.s32.totalorder %v241, %v267
      %vm316 = vcmp.eq.s32.totalorder %v242, %v266
      %vm317 = vcmp.eq.s32.totalorder %v242, %v267
      %vm318 = vcmp.eq.s32.totalorder %v243, %v266
      %vm319 = vcmp.eq.s32.totalorder %v243, %v267
      %vm320 = vcmp.eq.s32.totalorder %v244, %v266
      %vm321 = vcmp.eq.s32.totalorder %v244, %v267
      %vm322 = vcmp.eq.s32.totalorder %v245, %v266
      %vm323 = vcmp.eq.s32.totalorder %v245, %v267
      %vm324 = vcmp.eq.s32.totalorder %v246, %v266
      %vm325 = vcmp.eq.s32.totalorder %v246, %v267
      %vm326 = vcmp.eq.s32.totalorder %v247, %v266
      %vm327 = vcmp.eq.s32.totalorder %v247, %v267
      %vm328 = vcmp.eq.s32.totalorder %v248, %v266
      %vm329 = vcmp.eq.s32.totalorder %v248, %v267
      %vm330 = vcmp.eq.s32.totalorder %v249, %v266
      %vm331 = vcmp.eq.s32.totalorder %v249, %v267
      %vm332 = vcmp.eq.s32.totalorder %v250, %v266
      %vm333 = vcmp.eq.s32.totalorder %v250, %v267
      %vm334 = vcmp.eq.s32.totalorder %v251, %v266
      %vm335 = vcmp.eq.s32.totalorder %v251, %v267
      %vm336 = vcmp.eq.s32.totalorder %v252, %v266
      %vm337 = vcmp.eq.s32.totalorder %v252, %v267
      %vm338 = vcmp.eq.s32.totalorder %v253, %v266
      %vm339 = vcmp.eq.s32.totalorder %v253, %v267
      %vm340 = vcmp.eq.s32.totalorder %v254, %v266
      %vm341 = vcmp.eq.s32.totalorder %v254, %v267
      %vm342 = vcmp.eq.s32.totalorder %v255, %v266
      %vm343 = vcmp.eq.s32.totalorder %v255, %v267
      %vm344 = vcmp.eq.s32.totalorder %v256, %v266
      %vm345 = vcmp.eq.s32.totalorder %v256, %v267
      %vm346 = vcmp.eq.s32.totalorder %v257, %v266
      %vm347 = vcmp.eq.s32.totalorder %v257, %v267
      %vm348 = vcmp.eq.s32.totalorder %v258, %v266
      %vm349 = vcmp.eq.s32.totalorder %v258, %v267
      %vm350 = vcmp.eq.s32.totalorder %v259, %v266
      %vm351 = vcmp.eq.s32.totalorder %v259, %v267
      %vm352 = vcmp.eq.s32.totalorder %v260, %v266
      %vm353 = vcmp.eq.s32.totalorder %v260, %v267
      %vm354 = vcmp.eq.s32.totalorder %v261, %v266
      %vm355 = vcmp.eq.s32.totalorder %v261, %v267
      %vm356 = vcmp.eq.s32.totalorder %v262, %v266
      %vm357 = vcmp.eq.s32.totalorder %v262, %v267
      %vm358 = vcmp.eq.s32.totalorder %v263, %v266
      %vm359 = vcmp.eq.s32.totalorder %v263, %v267
      %vm360 = vcmp.eq.s32.totalorder %v264, %v266
      %vm361 = vcmp.eq.s32.totalorder %v264, %v267
      %vm362 = vcmp.eq.s32.totalorder %v265, %v266
      %vm363 = vcmp.eq.s32.totalorder %v265, %v267
      %v364 = vsel %vm268, 1, 0
      %v365 = vsel %vm269, 1, 0
      %v366 = vsel %vm270, 1, 0
      %v367 = vsel %vm271, 1, 0
      %v368 = vsel %vm272, 1, 0
      %v369 = vsel %vm273, 1, 0
      %v370 = vsel %vm274, 1, 0
      %v371 = vsel %vm275, 1, 0
      %v372 = vsel %vm276, 1, 0
      %v373 = vsel %vm277, 1, 0
      %v374 = vsel %vm278, 1, 0
      %v375 = vsel %vm279, 1, 0
      %v376 = vsel %vm280, 1, 0
      %v377 = vsel %vm281, 1, 0
      %v378 = vsel %vm282, 1, 0
      %v379 = vsel %vm283, 1, 0
      %v380 = vsel %vm284, 1, 0
      %v381 = vsel %vm285, 1, 0
      %v382 = vsel %vm286, 1, 0
      %v383 = vsel %vm287, 1, 0
      %v384 = vsel %vm288, 1, 0
      %v385 = vsel %vm289, 1, 0
      %v386 = vsel %vm290, 1, 0
      %v387 = vsel %vm291, 1, 0
      %v388 = vsel %vm292, 1, 0
      %v389 = vsel %vm293, 1, 0
      %v390 = vsel %vm294, 1, 0
      %v391 = vsel %vm295, 1, 0
      %v392 = vsel %vm296, 1, 0
      %v393 = vsel %vm297, 1, 0
      %v394 = vsel %vm298, 1, 0
      %v395 = vsel %vm299, 1, 0
      %v396 = vsel %vm300, 1, 0
      %v397 = vsel %vm301, 1, 0
      %v398 = vsel %vm302, 1, 0
      %v399 = vsel %vm303, 1, 0
      %v400 = vsel %vm304, 1, 0
      %v401 = vsel %vm305, 1, 0
      %v402 = vsel %vm306, 1, 0
      %v403 = vsel %vm307, 1, 0
      %v404 = vsel %vm308, 1, 0
      %v405 = vsel %vm309, 1, 0
      %v406 = vsel %vm310, 1, 0
      %v407 = vsel %vm311, 1, 0
      %v408 = vsel %vm312, 1, 0
      %v409 = vsel %vm313, 1, 0
      %v410 = vsel %vm314, 1, 0
      %v411 = vsel %vm315, 1, 0
      %v412 = vsel %vm316, 1, 0
      %v413 = vsel %vm317, 1, 0
      %v414 = vsel %vm318, 1, 0
      %v415 = vsel %vm319, 1, 0
      %v416 = vsel %vm320, 1, 0
      %v417 = vsel %vm321, 1, 0
      %v418 = vsel %vm322, 1, 0
      %v419 = vsel %vm323, 1, 0
      %v420 = vsel %vm324, 1, 0
      %v421 = vsel %vm325, 1, 0
      %v422 = vsel %vm326, 1, 0
      %v423 = vsel %vm327, 1, 0
      %v424 = vsel %vm328, 1, 0
      %v425 = vsel %vm329, 1, 0
      %v426 = vsel %vm330, 1, 0
      %v427 = vsel %vm331, 1, 0
      %v428 = vsel %vm332, 1, 0
      %v429 = vsel %vm333, 1, 0
      %v430 = vsel %vm334, 1, 0
      %v431 = vsel %vm335, 1, 0
      %v432 = vsel %vm336, 1, 0
      %v433 = vsel %vm337, 1, 0
      %v434 = vsel %vm338, 1, 0
      %v435 = vsel %vm339, 1, 0
      %v436 = vsel %vm340, 1, 0
      %v437 = vsel %vm341, 1, 0
      %v438 = vsel %vm342, 1, 0
      %v439 = vsel %vm343, 1, 0
      %v440 = vsel %vm344, 1, 0
      %v441 = vsel %vm345, 1, 0
      %v442 = vsel %vm346, 1, 0
      %v443 = vsel %vm347, 1, 0
      %v444 = vsel %vm348, 1, 0
      %v445 = vsel %vm349, 1, 0
      %v446 = vsel %vm350, 1, 0
      %v447 = vsel %vm351, 1, 0
      %v448 = vsel %vm352, 1, 0
      %v449 = vsel %vm353, 1, 0
      %v450 = vsel %vm354, 1, 0
      %v451 = vsel %vm355, 1, 0
      %v452 = vsel %vm356, 1, 0
      %v453 = vsel %vm357, 1, 0
      %v454 = vsel %vm358, 1, 0
      %v455 = vsel %vm359, 1, 0
      %v456 = vsel %vm360, 1, 0
      %v457 = vsel %vm361, 1, 0
      %v458 = vsel %vm362, 1, 0
      %v459 = vsel %vm363, 1, 0
      %v460 = vcvt.s32.f32 %v364
      %v461 = vcvt.s32.f32 %v365
      %v462 = vcvt.s32.f32 %v366
      %v463 = vcvt.s32.f32 %v367
      %v464 = vcvt.s32.f32 %v368
      %v465 = vcvt.s32.f32 %v369
      %v466 = vcvt.s32.f32 %v370
      %v467 = vcvt.s32.f32 %v371
      %v468 = vcvt.s32.f32 %v372
      %v469 = vcvt.s32.f32 %v373
      %v470 = vcvt.s32.f32 %v374
      %v471 = vcvt.s32.f32 %v375
      %v472 = vcvt.s32.f32 %v376
      %v473 = vcvt.s32.f32 %v377
      %v474 = vcvt.s32.f32 %v378
      %v475 = vcvt.s32.f32 %v379
      %v476 = vcvt.s32.f32 %v380
      %v477 = vcvt.s32.f32 %v381
      %v478 = vcvt.s32.f32 %v382
      %v479 = vcvt.s32.f32 %v383
      %v480 = vcvt.s32.f32 %v384
      %v481 = vcvt.s32.f32 %v385
      %v482 = vcvt.s32.f32 %v386
      %v483 = vcvt.s32.f32 %v387
      %v484 = vcvt.s32.f32 %v388
      %v485 = vcvt.s32.f32 %v389
      %v486 = vcvt.s32.f32 %v390
      %v487 = vcvt.s32.f32 %v391
      %v488 = vcvt.s32.f32 %v392
      %v489 = vcvt.s32.f32 %v393
      %v490 = vcvt.s32.f32 %v394
      %v491 = vcvt.s32.f32 %v395
      %v492 = vcvt.s32.f32 %v396
      %v493 = vcvt.s32.f32 %v397
      %v494 = vcvt.s32.f32 %v398
      %v495 = vcvt.s32.f32 %v399
      %v496 = vcvt.s32.f32 %v400
      %v497 = vcvt.s32.f32 %v401
      %v498 = vcvt.s32.f32 %v402
      %v499 = vcvt.s32.f32 %v403
      %v500 = vcvt.s32.f32 %v404
      %v501 = vcvt.s32.f32 %v405
      %v502 = vcvt.s32.f32 %v406
      %v503 = vcvt.s32.f32 %v407
      %v504 = vcvt.s32.f32 %v408
      %v505 = vcvt.s32.f32 %v409
      %v506 = vcvt.s32.f32 %v410
      %v507 = vcvt.s32.f32 %v411
      %v508 = vcvt.s32.f32 %v412
      %v509 = vcvt.s32.f32 %v413
      %v510 = vcvt.s32.f32 %v414
      %v511 = vcvt.s32.f32 %v415
      %v512 = vcvt.s32.f32 %v416
      %v513 = vcvt.s32.f32 %v417
      %v514 = vcvt.s32.f32 %v418
      %v515 = vcvt.s32.f32 %v419
      %v516 = vcvt.s32.f32 %v420
      %v517 = vcvt.s32.f32 %v421
      %v518 = vcvt.s32.f32 %v422
      %v519 = vcvt.s32.f32 %v423
      %v520 = vcvt.s32.f32 %v424
      %v521 = vcvt.s32.f32 %v425
      %v522 = vcvt.s32.f32 %v426
      %v523 = vcvt.s32.f32 %v427
      %v524 = vcvt.s32.f32 %v428
      %v525 = vcvt.s32.f32 %v429
      %v526 = vcvt.s32.f32 %v430
      %v527 = vcvt.s32.f32 %v431
      %v528 = vcvt.s32.f32 %v432
      %v529 = vcvt.s32.f32 %v433
      %v530 = vcvt.s32.f32 %v434
      %v531 = vcvt.s32.f32 %v435
      %v532 = vcvt.s32.f32 %v436
      %v533 = vcvt.s32.f32 %v437
      %v534 = vcvt.s32.f32 %v438
      %v535 = vcvt.s32.f32 %v439
      %v536 = vcvt.s32.f32 %v440
      %v537 = vcvt.s32.f32 %v441
      %v538 = vcvt.s32.f32 %v442
      %v539 = vcvt.s32.f32 %v443
      %v540 = vcvt.s32.f32 %v444
      %v541 = vcvt.s32.f32 %v445
      %v542 = vcvt.s32.f32 %v446
      %v543 = vcvt.s32.f32 %v447
      %v544 = vcvt.s32.f32 %v448
      %v545 = vcvt.s32.f32 %v449
      %v546 = vcvt.s32.f32 %v450
      %v547 = vcvt.s32.f32 %v451
      %v548 = vcvt.s32.f32 %v452
      %v549 = vcvt.s32.f32 %v453
      %v550 = vcvt.s32.f32 %v454
      %v551 = vcvt.s32.f32 %v455
      %v552 = vcvt.s32.f32 %v456
      %v553 = vcvt.s32.f32 %v457
      %v554 = vcvt.s32.f32 %v458
      %v555 = vcvt.s32.f32 %v459
      %v556 = vadd.s32 %v218, 384
      %v557 = vadd.s32 %v218, 392
      %v558 = vadd.s32 %v218, 400
      %v559 = vadd.s32 %v218, 408
      %v560 = vadd.s32 %v218, 416
      %v561 = vadd.s32 %v218, 424
      %v562 = vadd.s32 %v218, 432
      %v563 = vadd.s32 %v218, 440
      %v564 = vadd.s32 %v218, 448
      %v565 = vadd.s32 %v218, 456
      %v566 = vadd.s32 %v218, 464
      %v567 = vadd.s32 %v218, 472
      %v568 = vadd.s32 %v218, 480
      %v569 = vadd.s32 %v218, 488
      %v570 = vadd.s32 %v218, 496
      %v571 = vadd.s32 %v218, 504
      %v572 = vperm.slane %v216, 0
      %v573 = vperm.slane %v216, 1
      %vm574 = vcmp.eq.s32.totalorder %v218, %v572
      %vm575 = vcmp.eq.s32.totalorder %v218, %v573
      %vm576 = vcmp.eq.s32.totalorder %v219, %v572
      %vm577 = vcmp.eq.s32.totalorder %v219, %v573
      %vm578 = vcmp.eq.s32.totalorder %v220, %v572
      %vm579 = vcmp.eq.s32.totalorder %v220, %v573
      %vm580 = vcmp.eq.s32.totalorder %v221, %v572
      %vm581 = vcmp.eq.s32.totalorder %v221, %v573
      %vm582 = vcmp.eq.s32.totalorder %v222, %v572
      %vm583 = vcmp.eq.s32.totalorder %v222, %v573
      %vm584 = vcmp.eq.s32.totalorder %v223, %v572
      %vm585 = vcmp.eq.s32.totalorder %v223, %v573
      %vm586 = vcmp.eq.s32.totalorder %v224, %v572
      %vm587 = vcmp.eq.s32.totalorder %v224, %v573
      %vm588 = vcmp.eq.s32.totalorder %v225, %v572
      %vm589 = vcmp.eq.s32.totalorder %v225, %v573
      %vm590 = vcmp.eq.s32.totalorder %v226, %v572
      %vm591 = vcmp.eq.s32.totalorder %v226, %v573
      %vm592 = vcmp.eq.s32.totalorder %v227, %v572
      %vm593 = vcmp.eq.s32.totalorder %v227, %v573
      %vm594 = vcmp.eq.s32.totalorder %v228, %v572
      %vm595 = vcmp.eq.s32.totalorder %v228, %v573
      %vm596 = vcmp.eq.s32.totalorder %v229, %v572
      %vm597 = vcmp.eq.s32.totalorder %v229, %v573
      %vm598 = vcmp.eq.s32.totalorder %v230, %v572
      %vm599 = vcmp.eq.s32.totalorder %v230, %v573
      %vm600 = vcmp.eq.s32.totalorder %v231, %v572
      %vm601 = vcmp.eq.s32.totalorder %v231, %v573
      %vm602 = vcmp.eq.s32.totalorder %v232, %v572
      %vm603 = vcmp.eq.s32.totalorder %v232, %v573
      %vm604 = vcmp.eq.s32.totalorder %v233, %v572
      %vm605 = vcmp.eq.s32.totalorder %v233, %v573
      %vm606 = vcmp.eq.s32.totalorder %v234, %v572
      %vm607 = vcmp.eq.s32.totalorder %v234, %v573
      %vm608 = vcmp.eq.s32.totalorder %v235, %v572
      %vm609 = vcmp.eq.s32.totalorder %v235, %v573
      %vm610 = vcmp.eq.s32.totalorder %v236, %v572
      %vm611 = vcmp.eq.s32.totalorder %v236, %v573
      %vm612 = vcmp.eq.s32.totalorder %v237, %v572
      %vm613 = vcmp.eq.s32.totalorder %v237, %v573
      %vm614 = vcmp.eq.s32.totalorder %v238, %v572
      %vm615 = vcmp.eq.s32.totalorder %v238, %v573
      %vm616 = vcmp.eq.s32.totalorder %v239, %v572
      %vm617 = vcmp.eq.s32.totalorder %v239, %v573
      %vm618 = vcmp.eq.s32.totalorder %v240, %v572
      %vm619 = vcmp.eq.s32.totalorder %v240, %v573
      %vm620 = vcmp.eq.s32.totalorder %v241, %v572
      %vm621 = vcmp.eq.s32.totalorder %v241, %v573
      %vm622 = vcmp.eq.s32.totalorder %v242, %v572
      %vm623 = vcmp.eq.s32.totalorder %v242, %v573
      %vm624 = vcmp.eq.s32.totalorder %v243, %v572
      %vm625 = vcmp.eq.s32.totalorder %v243, %v573
      %vm626 = vcmp.eq.s32.totalorder %v244, %v572
      %vm627 = vcmp.eq.s32.totalorder %v244, %v573
      %vm628 = vcmp.eq.s32.totalorder %v245, %v572
      %vm629 = vcmp.eq.s32.totalorder %v245, %v573
      %vm630 = vcmp.eq.s32.totalorder %v246, %v572
      %vm631 = vcmp.eq.s32.totalorder %v246, %v573
      %vm632 = vcmp.eq.s32.totalorder %v247, %v572
      %vm633 = vcmp.eq.s32.totalorder %v247, %v573
      %vm634 = vcmp.eq.s32.totalorder %v248, %v572
      %vm635 = vcmp.eq.s32.totalorder %v248, %v573
      %vm636 = vcmp.eq.s32.totalorder %v249, %v572
      %vm637 = vcmp.eq.s32.totalorder %v249, %v573
      %vm638 = vcmp.eq.s32.totalorder %v250, %v572
      %vm639 = vcmp.eq.s32.totalorder %v250, %v573
      %vm640 = vcmp.eq.s32.totalorder %v251, %v572
      %vm641 = vcmp.eq.s32.totalorder %v251, %v573
      %vm642 = vcmp.eq.s32.totalorder %v252, %v572
      %vm643 = vcmp.eq.s32.totalorder %v252, %v573
      %vm644 = vcmp.eq.s32.totalorder %v253, %v572
      %vm645 = vcmp.eq.s32.totalorder %v253, %v573
      %vm646 = vcmp.eq.s32.totalorder %v254, %v572
      %vm647 = vcmp.eq.s32.totalorder %v254, %v573
      %vm648 = vcmp.eq.s32.totalorder %v255, %v572
      %vm649 = vcmp.eq.s32.totalorder %v255, %v573
      %vm650 = vcmp.eq.s32.totalorder %v256, %v572
      %vm651 = vcmp.eq.s32.totalorder %v256, %v573
      %vm652 = vcmp.eq.s32.totalorder %v257, %v572
      %vm653 = vcmp.eq.s32.totalorder %v257, %v573
      %vm654 = vcmp.eq.s32.totalorder %v258, %v572
      %vm655 = vcmp.eq.s32.totalorder %v258, %v573
      %vm656 = vcmp.eq.s32.totalorder %v259, %v572
      %vm657 = vcmp.eq.s32.totalorder %v259, %v573
      %vm658 = vcmp.eq.s32.totalorder %v260, %v572
      %vm659 = vcmp.eq.s32.totalorder %v260, %v573
      %vm660 = vcmp.eq.s32.totalorder %v261, %v572
      %vm661 = vcmp.eq.s32.totalorder %v261, %v573
      %vm662 = vcmp.eq.s32.totalorder %v262, %v572
      %vm663 = vcmp.eq.s32.totalorder %v262, %v573
      %vm664 = vcmp.eq.s32.totalorder %v263, %v572
      %vm665 = vcmp.eq.s32.totalorder %v263, %v573
      %vm666 = vcmp.eq.s32.totalorder %v264, %v572
      %vm667 = vcmp.eq.s32.totalorder %v264, %v573
      %vm668 = vcmp.eq.s32.totalorder %v265, %v572
      %vm669 = vcmp.eq.s32.totalorder %v265, %v573
      %vm670 = vcmp.eq.s32.totalorder %v556, %v572
      %vm671 = vcmp.eq.s32.totalorder %v556, %v573
      %vm672 = vcmp.eq.s32.totalorder %v557, %v572
      %vm673 = vcmp.eq.s32.totalorder %v557, %v573
      %vm674 = vcmp.eq.s32.totalorder %v558, %v572
      %vm675 = vcmp.eq.s32.totalorder %v558, %v573
      %vm676 = vcmp.eq.s32.totalorder %v559, %v572
      %vm677 = vcmp.eq.s32.totalorder %v559, %v573
      %vm678 = vcmp.eq.s32.totalorder %v560, %v572
      %vm679 = vcmp.eq.s32.totalorder %v560, %v573
      %vm680 = vcmp.eq.s32.totalorder %v561, %v572
      %vm681 = vcmp.eq.s32.totalorder %v561, %v573
      %vm682 = vcmp.eq.s32.totalorder %v562, %v572
      %vm683 = vcmp.eq.s32.totalorder %v562, %v573
      %vm684 = vcmp.eq.s32.totalorder %v563, %v572
      %vm685 = vcmp.eq.s32.totalorder %v563, %v573
      %vm686 = vcmp.eq.s32.totalorder %v564, %v572
      %vm687 = vcmp.eq.s32.totalorder %v564, %v573
      %vm688 = vcmp.eq.s32.totalorder %v565, %v572
      %vm689 = vcmp.eq.s32.totalorder %v565, %v573
      %vm690 = vcmp.eq.s32.totalorder %v566, %v572
      %vm691 = vcmp.eq.s32.totalorder %v566, %v573
      %vm692 = vcmp.eq.s32.totalorder %v567, %v572
      %vm693 = vcmp.eq.s32.totalorder %v567, %v573
      %vm694 = vcmp.eq.s32.totalorder %v568, %v572
      %vm695 = vcmp.eq.s32.totalorder %v568, %v573
      %vm696 = vcmp.eq.s32.totalorder %v569, %v572
      %vm697 = vcmp.eq.s32.totalorder %v569, %v573
      %vm698 = vcmp.eq.s32.totalorder %v570, %v572
      %vm699 = vcmp.eq.s32.totalorder %v570, %v573
      %vm700 = vcmp.eq.s32.totalorder %v571, %v572
      %vm701 = vcmp.eq.s32.totalorder %v571, %v573
      %v702 = vsel %vm574, 1, 0
      %v703 = vsel %vm575, 1, 0
      %v704 = vsel %vm576, 1, 0
      %v705 = vsel %vm577, 1, 0
      %v706 = vsel %vm578, 1, 0
      %v707 = vsel %vm579, 1, 0
      %v708 = vsel %vm580, 1, 0
      %v709 = vsel %vm581, 1, 0
      %v710 = vsel %vm582, 1, 0
      %v711 = vsel %vm583, 1, 0
      %v712 = vsel %vm584, 1, 0
      %v713 = vsel %vm585, 1, 0
      %v714 = vsel %vm586, 1, 0
      %v715 = vsel %vm587, 1, 0
      %v716 = vsel %vm588, 1, 0
      %v717 = vsel %vm589, 1, 0
      %v718 = vsel %vm590, 1, 0
      %v719 = vsel %vm591, 1, 0
      %v720 = vsel %vm592, 1, 0
      %v721 = vsel %vm593, 1, 0
      %v722 = vsel %vm594, 1, 0
      %v723 = vsel %vm595, 1, 0
      %v724 = vsel %vm596, 1, 0
      %v725 = vsel %vm597, 1, 0
      %v726 = vsel %vm598, 1, 0
      %v727 = vsel %vm599, 1, 0
      %v728 = vsel %vm600, 1, 0
      %v729 = vsel %vm601, 1, 0
      %v730 = vsel %vm602, 1, 0
      %v731 = vsel %vm603, 1, 0
      %v732 = vsel %vm604, 1, 0
      %v733 = vsel %vm605, 1, 0
      %v734 = vsel %vm606, 1, 0
      %v735 = vsel %vm607, 1, 0
      %v736 = vsel %vm608, 1, 0
      %v737 = vsel %vm609, 1, 0
      %v738 = vsel %vm610, 1, 0
      %v739 = vsel %vm611, 1, 0
      %v740 = vsel %vm612, 1, 0
      %v741 = vsel %vm613, 1, 0
      %v742 = vsel %vm614, 1, 0
      %v743 = vsel %vm615, 1, 0
      %v744 = vsel %vm616, 1, 0
      %v745 = vsel %vm617, 1, 0
      %v746 = vsel %vm618, 1, 0
      %v747 = vsel %vm619, 1, 0
      %v748 = vsel %vm620, 1, 0
      %v749 = vsel %vm621, 1, 0
      %v750 = vsel %vm622, 1, 0
      %v751 = vsel %vm623, 1, 0
      %v752 = vsel %vm624, 1, 0
      %v753 = vsel %vm625, 1, 0
      %v754 = vsel %vm626, 1, 0
      %v755 = vsel %vm627, 1, 0
      %v756 = vsel %vm628, 1, 0
      %v757 = vsel %vm629, 1, 0
      %v758 = vsel %vm630, 1, 0
      %v759 = vsel %vm631, 1, 0
      %v760 = vsel %vm632, 1, 0
      %v761 = vsel %vm633, 1, 0
      %v762 = vsel %vm634, 1, 0
      %v763 = vsel %vm635, 1, 0
      %v764 = vsel %vm636, 1, 0
      %v765 = vsel %vm637, 1, 0
      %v766 = vsel %vm638, 1, 0
      %v767 = vsel %vm639, 1, 0
      %v768 = vsel %vm640, 1, 0
      %v769 = vsel %vm641, 1, 0
      %v770 = vsel %vm642, 1, 0
      %v771 = vsel %vm643, 1, 0
      %v772 = vsel %vm644, 1, 0
      %v773 = vsel %vm645, 1, 0
      %v774 = vsel %vm646, 1, 0
      %v775 = vsel %vm647, 1, 0
      %v776 = vsel %vm648, 1, 0
      %v777 = vsel %vm649, 1, 0
      %v778 = vsel %vm650, 1, 0
      %v779 = vsel %vm651, 1, 0
      %v780 = vsel %vm652, 1, 0
      %v781 = vsel %vm653, 1, 0
      %v782 = vsel %vm654, 1, 0
      %v783 = vsel %vm655, 1, 0
      %v784 = vsel %vm656, 1, 0
      %v785 = vsel %vm657, 1, 0
      %v786 = vsel %vm658, 1, 0
      %v787 = vsel %vm659, 1, 0
      %v788 = vsel %vm660, 1, 0
      %v789 = vsel %vm661, 1, 0
      %v790 = vsel %vm662, 1, 0
      %v791 = vsel %vm663, 1, 0
      %v792 = vsel %vm664, 1, 0
      %v793 = vsel %vm665, 1, 0
      %v794 = vsel %vm666, 1, 0
      %v795 = vsel %vm667, 1, 0
      %v796 = vsel %vm668, 1, 0
      %v797 = vsel %vm669, 1, 0
      %v798 = vsel %vm670, 1, 0
      %v799 = vsel %vm671, 1, 0
      %v800 = vsel %vm672, 1, 0
      %v801 = vsel %vm673, 1, 0
      %v802 = vsel %vm674, 1, 0
      %v803 = vsel %vm675, 1, 0
      %v804 = vsel %vm676, 1, 0
      %v805 = vsel %vm677, 1, 0
      %v806 = vsel %vm678, 1, 0
      %v807 = vsel %vm679, 1, 0
      %v808 = vsel %vm680, 1, 0
      %v809 = vsel %vm681, 1, 0
      %v810 = vsel %vm682, 1, 0
      %v811 = vsel %vm683, 1, 0
      %v812 = vsel %vm684, 1, 0
      %v813 = vsel %vm685, 1, 0
      %v814 = vsel %vm686, 1, 0
      %v815 = vsel %vm687, 1, 0
      %v816 = vsel %vm688, 1, 0
      %v817 = vsel %vm689, 1, 0
      %v818 = vsel %vm690, 1, 0
      %v819 = vsel %vm691, 1, 0
      %v820 = vsel %vm692, 1, 0
      %v821 = vsel %vm693, 1, 0
      %v822 = vsel %vm694, 1, 0
      %v823 = vsel %vm695, 1, 0
      %v824 = vsel %vm696, 1, 0
      %v825 = vsel %vm697, 1, 0
      %v826 = vsel %vm698, 1, 0
      %v827 = vsel %vm699, 1, 0
      %v828 = vsel %vm700, 1, 0
      %v829 = vsel %vm701, 1, 0
      %v830 = vcvt.s32.f32 %v702
      %v831 = vcvt.s32.f32 %v703
      %v832 = vcvt.s32.f32 %v704
      %v833 = vcvt.s32.f32 %v705
      %v834 = vcvt.s32.f32 %v706
      %v835 = vcvt.s32.f32 %v707
      %v836 = vcvt.s32.f32 %v708
      %v837 = vcvt.s32.f32 %v709
      %v838 = vcvt.s32.f32 %v710
      %v839 = vcvt.s32.f32 %v711
      %v840 = vcvt.s32.f32 %v712
      %v841 = vcvt.s32.f32 %v713
      %v842 = vcvt.s32.f32 %v714
      %v843 = vcvt.s32.f32 %v715
      %v844 = vcvt.s32.f32 %v716
      %v845 = vcvt.s32.f32 %v717
      %v846 = vcvt.s32.f32 %v718
      %v847 = vcvt.s32.f32 %v719
      %v848 = vcvt.s32.f32 %v720
      %v849 = vcvt.s32.f32 %v721
      %v850 = vcvt.s32.f32 %v722
      %v851 = vcvt.s32.f32 %v723
      %v852 = vcvt.s32.f32 %v724
      %v853 = vcvt.s32.f32 %v725
      %v854 = vcvt.s32.f32 %v726
      %v855 = vcvt.s32.f32 %v727
      %v856 = vcvt.s32.f32 %v728
      %v857 = vcvt.s32.f32 %v729
      %v858 = vcvt.s32.f32 %v730
      %v859 = vcvt.s32.f32 %v731
      %v860 = vcvt.s32.f32 %v732
      %v861 = vcvt.s32.f32 %v733
      %v862 = vcvt.s32.f32 %v734
      %v863 = vcvt.s32.f32 %v735
      %v864 = vcvt.s32.f32 %v736
      %v865 = vcvt.s32.f32 %v737
      %v866 = vcvt.s32.f32 %v738
      %v867 = vcvt.s32.f32 %v739
      %v868 = vcvt.s32.f32 %v740
      %v869 = vcvt.s32.f32 %v741
      %v870 = vcvt.s32.f32 %v742
      %v871 = vcvt.s32.f32 %v743
      %v872 = vcvt.s32.f32 %v744
      %v873 = vcvt.s32.f32 %v745
      %v874 = vcvt.s32.f32 %v746
      %v875 = vcvt.s32.f32 %v747
      %v876 = vcvt.s32.f32 %v748
      %v877 = vcvt.s32.f32 %v749
      %v878 = vcvt.s32.f32 %v750
      %v879 = vcvt.s32.f32 %v751
      %v880 = vcvt.s32.f32 %v752
      %v881 = vcvt.s32.f32 %v753
      %v882 = vcvt.s32.f32 %v754
      %v883 = vcvt.s32.f32 %v755
      %v884 = vcvt.s32.f32 %v756
      %v885 = vcvt.s32.f32 %v757
      %v886 = vcvt.s32.f32 %v758
      %v887 = vcvt.s32.f32 %v759
      %v888 = vcvt.s32.f32 %v760
      %v889 = vcvt.s32.f32 %v761
      %v890 = vcvt.s32.f32 %v762
      %v891 = vcvt.s32.f32 %v763
      %v892 = vcvt.s32.f32 %v764
      %v893 = vcvt.s32.f32 %v765
      %v894 = vcvt.s32.f32 %v766
      %v895 = vcvt.s32.f32 %v767
      %v896 = vcvt.s32.f32 %v768
      %v897 = vcvt.s32.f32 %v769
      %v898 = vcvt.s32.f32 %v770
      %v899 = vcvt.s32.f32 %v771
      %v900 = vcvt.s32.f32 %v772
      %v901 = vcvt.s32.f32 %v773
      %v902 = vcvt.s32.f32 %v774
      %v903 = vcvt.s32.f32 %v775
      %v904 = vcvt.s32.f32 %v776
      %v905 = vcvt.s32.f32 %v777
      %v906 = vcvt.s32.f32 %v778
      %v907 = vcvt.s32.f32 %v779
      %v908 = vcvt.s32.f32 %v780
      %v909 = vcvt.s32.f32 %v781
      %v910 = vcvt.s32.f32 %v782
      %v911 = vcvt.s32.f32 %v783
      %v912 = vcvt.s32.f32 %v784
      %v913 = vcvt.s32.f32 %v785
      %v914 = vcvt.s32.f32 %v786
      %v915 = vcvt.s32.f32 %v787
      %v916 = vcvt.s32.f32 %v788
      %v917 = vcvt.s32.f32 %v789
      %v918 = vcvt.s32.f32 %v790
      %v919 = vcvt.s32.f32 %v791
      %v920 = vcvt.s32.f32 %v792
      %v921 = vcvt.s32.f32 %v793
      %v922 = vcvt.s32.f32 %v794
      %v923 = vcvt.s32.f32 %v795
      %v924 = vcvt.s32.f32 %v796
      %v925 = vcvt.s32.f32 %v797
      %v926 = vcvt.s32.f32 %v798
      %v927 = vcvt.s32.f32 %v799
      %v928 = vcvt.s32.f32 %v800
      %v929 = vcvt.s32.f32 %v801
      %v930 = vcvt.s32.f32 %v802
      %v931 = vcvt.s32.f32 %v803
      %v932 = vcvt.s32.f32 %v804
      %v933 = vcvt.s32.f32 %v805
      %v934 = vcvt.s32.f32 %v806
      %v935 = vcvt.s32.f32 %v807
      %v936 = vcvt.s32.f32 %v808
      %v937 = vcvt.s32.f32 %v809
      %v938 = vcvt.s32.f32 %v810
      %v939 = vcvt.s32.f32 %v811
      %v940 = vcvt.s32.f32 %v812
      %v941 = vcvt.s32.f32 %v813
      %v942 = vcvt.s32.f32 %v814
      %v943 = vcvt.s32.f32 %v815
      %v944 = vcvt.s32.f32 %v816
      %v945 = vcvt.s32.f32 %v817
      %v946 = vcvt.s32.f32 %v818
      %v947 = vcvt.s32.f32 %v819
      %v948 = vcvt.s32.f32 %v820
      %v949 = vcvt.s32.f32 %v821
      %v950 = vcvt.s32.f32 %v822
      %v951 = vcvt.s32.f32 %v823
      %v952 = vcvt.s32.f32 %v824
      %v953 = vcvt.s32.f32 %v825
      %v954 = vcvt.s32.f32 %v826
      %v955 = vcvt.s32.f32 %v827
      %v956 = vcvt.s32.f32 %v828
      %v957 = vcvt.s32.f32 %v829
      %v958 = vld [vmem:[%s2] sm:$0xff]
      %v959 = vld [vmem:[%s2 + $0x8] sm:$0xf]
      %962 = vst [vmem:[#allocation1] ss:$2 sm:$0xff] %v958
      %s963 = scalar_lea.vmem [#allocation1], 16
      %964 = vst [vmem:[%s963] ss:$2 sm:$0xff] %v959
      %v965 = vld.sshfl [vmem:[#allocation1] sm:$0xff pattern:$0x75316420]
      %v966 = vld.sshfl [vmem:[#allocation1 + $0x8] sm:$0xff pattern:$0x75316420]
      %v967 = vld.sshfl [vmem:[#allocation1 + $0x10] sm:$0xff pattern:$0x75316420]
      %971 = vmatpush.msra.mxu0 %v490
      %972 = vmatpush.msra.mxu0 %v488
      %973 = vmatpush.msra.mxu0 %v486
      %974 = vmatpush.msra.mxu0 %v484
      %975 = vmatpush.msra.mxu0 %v482
      %976 = vmatpush.msra.mxu0 %v480
      %977 = vmatpush.msra.mxu0 %v478
      %978 = vmatpush.msra.mxu0 %v476
      %979 = vmatpush.msra.mxu0 %v474
      %980 = vmatpush.msra.mxu0 %v472
      %981 = vmatpush.msra.mxu0 %v470
      %982 = vmatpush.msra.mxu0 %v468
      %983 = vmatpush.msra.mxu0 %v466
      %984 = vmatpush.msra.mxu0 %v464
      %985 = vmatpush.msra.mxu0 %v462
      %986 = vmatpush.msra.mxu0 %v460
      %987 = vmatmul.f32.gmra.mxu0 %v965
      %v988 = vpop.f32.mrf.mxu0
      %v989 = vadd.f32 0.0, %v988
      %990 = vdwg.mxu0
      %991 = vmatpush.msra.mxu0 %v522
      %992 = vmatpush.msra.mxu0 %v520
      %993 = vmatpush.msra.mxu0 %v518
      %994 = vmatpush.msra.mxu0 %v516
      %995 = vmatpush.msra.mxu0 %v514
      %996 = vmatpush.msra.mxu0 %v512
      %997 = vmatpush.msra.mxu0 %v510
      %998 = vmatpush.msra.mxu0 %v508
      %999 = vmatpush.msra.mxu0 %v506
      %1000 = vmatpush.msra.mxu0 %v504
      %1001 = vmatpush.msra.mxu0 %v502
      %1002 = vmatpush.msra.mxu0 %v500
      %1003 = vmatpush.msra.mxu0 %v498
      %1004 = vmatpush.msra.mxu0 %v496
      %1005 = vmatpush.msra.mxu0 %v494
      %1006 = vmatpush.msra.mxu0 %v492
      %1007 = vmatmul.f32.gmra.mxu0 %v966
      %v1008 = vpop.f32.mrf.mxu0
      %v1009 = vadd.f32 %v989, %v1008
      %1010 = vdwg.mxu0
      %1011 = vmatpush.msra.mxu0 %v554
      %1012 = vmatpush.msra.mxu0 %v552
      %1013 = vmatpush.msra.mxu0 %v550
      %1014 = vmatpush.msra.mxu0 %v548
      %1015 = vmatpush.msra.mxu0 %v546
      %1016 = vmatpush.msra.mxu0 %v544
      %1017 = vmatpush.msra.mxu0 %v542
      %1018 = vmatpush.msra.mxu0 %v540
      %1019 = vmatpush.msra.mxu0 %v538
      %1020 = vmatpush.msra.mxu0 %v536
      %1021 = vmatpush.msra.mxu0 %v534
      %1022 = vmatpush.msra.mxu0 %v532
      %1023 = vmatpush.msra.mxu0 %v530
      %1024 = vmatpush.msra.mxu0 %v528
      %1025 = vmatpush.msra.mxu0 %v526
      %1026 = vmatpush.msra.mxu0 %v524
      %1027 = vmatmul.f32.gmra.mxu0 %v967
      %v1028 = vpop.f32.mrf.mxu0
      %v1029 = vadd.f32 %v1009, %v1028
      %1030 = vdwg.mxu0
      %1031 = vmatpush.msra.mxu0 %v491
      %1032 = vmatpush.msra.mxu0 %v489
      %1033 = vmatpush.msra.mxu0 %v487
      %1034 = vmatpush.msra.mxu0 %v485
      %1035 = vmatpush.msra.mxu0 %v483
      %1036 = vmatpush.msra.mxu0 %v481
      %1037 = vmatpush.msra.mxu0 %v479
      %1038 = vmatpush.msra.mxu0 %v477
      %1039 = vmatpush.msra.mxu0 %v475
      %1040 = vmatpush.msra.mxu0 %v473
      %1041 = vmatpush.msra.mxu0 %v471
      %1042 = vmatpush.msra.mxu0 %v469
      %1043 = vmatpush.msra.mxu0 %v467
      %1044 = vmatpush.msra.mxu0 %v465
      %1045 = vmatpush.msra.mxu0 %v463
      %1046 = vmatpush.msra.mxu0 %v461
      %1047 = vmatmul.f32.gmra.mxu0 %v965
      %v1048 = vpop.f32.mrf.mxu0
      %v1049 = vadd.f32 0.0, %v1048
      %1050 = vdwg.mxu0
      %1051 = vmatpush.msra.mxu0 %v523
      %1052 = vmatpush.msra.mxu0 %v521
      %1053 = vmatpush.msra.mxu0 %v519
      %1054 = vmatpush.msra.mxu0 %v517
      %1055 = vmatpush.msra.mxu0 %v515
      %1056 = vmatpush.msra.mxu0 %v513
      %1057 = vmatpush.msra.mxu0 %v511
      %1058 = vmatpush.msra.mxu0 %v509
      %1059 = vmatpush.msra.mxu0 %v507
      %1060 = vmatpush.msra.mxu0 %v505
      %1061 = vmatpush.msra.mxu0 %v503
      %1062 = vmatpush.msra.mxu0 %v501
      %1063 = vmatpush.msra.mxu0 %v499
      %1064 = vmatpush.msra.mxu0 %v497
      %1065 = vmatpush.msra.mxu0 %v495
      %1066 = vmatpush.msra.mxu0 %v493
      %1067 = vmatmul.f32.gmra.mxu0 %v966
      %v1068 = vpop.f32.mrf.mxu0
      %v1069 = vadd.f32 %v1049, %v1068
      %1070 = vdwg.mxu0
      %1071 = vmatpush.msra.mxu0 %v555
      %1072 = vmatpush.msra.mxu0 %v553
      %1073 = vmatpush.msra.mxu0 %v551
      %1074 = vmatpush.msra.mxu0 %v549
      %1075 = vmatpush.msra.mxu0 %v547
      %1076 = vmatpush.msra.mxu0 %v545
      %1077 = vmatpush.msra.mxu0 %v543
      %1078 = vmatpush.msra.mxu0 %v541
      %1079 = vmatpush.msra.mxu0 %v539
      %1080 = vmatpush.msra.mxu0 %v537
      %1081 = vmatpush.msra.mxu0 %v535
      %1082 = vmatpush.msra.mxu0 %v533
      %1083 = vmatpush.msra.mxu0 %v531
      %1084 = vmatpush.msra.mxu0 %v529
      %1085 = vmatpush.msra.mxu0 %v527
      %1086 = vmatpush.msra.mxu0 %v525
      %1087 = vmatmul.f32.gmra.mxu0 %v967
      %v1088 = vpop.f32.mrf.mxu0
      %v1089 = vadd.f32 %v1069, %v1088
      %1090 = vdwg.mxu0
      %v1091 = vld [vmem:[%s3] sm:$0xff]
      %v1092 = vld [vmem:[%s3 + $0x8] sm:$0xff]
      %1095 = vst [vmem:[#allocation1] ss:$2 sm:$0xff] %v1091
      %s1096 = scalar_lea.vmem [#allocation1], 16
      %1097 = vst [vmem:[%s1096] ss:$2 sm:$0xff] %v1092
      %v1098 = vld.sshfl [vmem:[#allocation1] sm:$0xff pattern:$0x75316420]
      %v1099 = vld.sshfl [vmem:[#allocation1 + $0x8] sm:$0xff pattern:$0x75316420]
      %v1100 = vld.sshfl [vmem:[#allocation1 + $0x10] sm:$0xff pattern:$0x75316420]
      %v1101 = vld.sshfl [vmem:[#allocation1 + $0x18] sm:$0xff pattern:$0x75316420]
      %1106 = vmatpush.msra.mxu0 %v860
      %1107 = vmatpush.msra.mxu0 %v858
      %1108 = vmatpush.msra.mxu0 %v856
      %1109 = vmatpush.msra.mxu0 %v854
      %1110 = vmatpush.msra.mxu0 %v852
      %1111 = vmatpush.msra.mxu0 %v850
      %1112 = vmatpush.msra.mxu0 %v848
      %1113 = vmatpush.msra.mxu0 %v846
      %1114 = vmatpush.msra.mxu0 %v844
      %1115 = vmatpush.msra.mxu0 %v842
      %1116 = vmatpush.msra.mxu0 %v840
      %1117 = vmatpush.msra.mxu0 %v838
      %1118 = vmatpush.msra.mxu0 %v836
      %1119 = vmatpush.msra.mxu0 %v834
      %1120 = vmatpush.msra.mxu0 %v832
      %1121 = vmatpush.msra.mxu0 %v830
      %1122 = vmatmul.f32.gmra.mxu0 %v1098
      %v1123 = vpop.f32.mrf.mxu0
      %v1124 = vadd.f32 0.0, %v1123
      %1125 = vdwg.mxu0
      %1126 = vmatpush.msra.mxu0 %v892
      %1127 = vmatpush.msra.mxu0 %v890
      %1128 = vmatpush.msra.mxu0 %v888
      %1129 = vmatpush.msra.mxu0 %v886
      %1130 = vmatpush.msra.mxu0 %v884
      %1131 = vmatpush.msra.mxu0 %v882
      %1132 = vmatpush.msra.mxu0 %v880
      %1133 = vmatpush.msra.mxu0 %v878
      %1134 = vmatpush.msra.mxu0 %v876
      %1135 = vmatpush.msra.mxu0 %v874
      %1136 = vmatpush.msra.mxu0 %v872
      %1137 = vmatpush.msra.mxu0 %v870
      %1138 = vmatpush.msra.mxu0 %v868
      %1139 = vmatpush.msra.mxu0 %v866
      %1140 = vmatpush.msra.mxu0 %v864
      %1141 = vmatpush.msra.mxu0 %v862
      %1142 = vmatmul.f32.gmra.mxu0 %v1099
      %v1143 = vpop.f32.mrf.mxu0
      %v1144 = vadd.f32 %v1124, %v1143
      %1145 = vdwg.mxu0
      %1146 = vmatpush.msra.mxu0 %v924
      %1147 = vmatpush.msra.mxu0 %v922
      %1148 = vmatpush.msra.mxu0 %v920
      %1149 = vmatpush.msra.mxu0 %v918
      %1150 = vmatpush.msra.mxu0 %v916
      %1151 = vmatpush.msra.mxu0 %v914
      %1152 = vmatpush.msra.mxu0 %v912
      %1153 = vmatpush.msra.mxu0 %v910
      %1154 = vmatpush.msra.mxu0 %v908
      %1155 = vmatpush.msra.mxu0 %v906
      %1156 = vmatpush.msra.mxu0 %v904
      %1157 = vmatpush.msra.mxu0 %v902
      %1158 = vmatpush.msra.mxu0 %v900
      %1159 = vmatpush.msra.mxu0 %v898
      %1160 = vmatpush.msra.mxu0 %v896
      %1161 = vmatpush.msra.mxu0 %v894
      %1162 = vmatmul.f32.gmra.mxu0 %v1100
      %v1163 = vpop.f32.mrf.mxu0
      %v1164 = vadd.f32 %v1144, %v1163
      %1165 = vdwg.mxu0
      %1166 = vmatpush.msra.mxu0 %v956
      %1167 = vmatpush.msra.mxu0 %v954
      %1168 = vmatpush.msra.mxu0 %v952
      %1169 = vmatpush.msra.mxu0 %v950
      %1170 = vmatpush.msra.mxu0 %v948
      %1171 = vmatpush.msra.mxu0 %v946
      %1172 = vmatpush.msra.mxu0 %v944
      %1173 = vmatpush.msra.mxu0 %v942
      %1174 = vmatpush.msra.mxu0 %v940
      %1175 = vmatpush.msra.mxu0 %v938
      %1176 = vmatpush.msra.mxu0 %v936
      %1177 = vmatpush.msra.mxu0 %v934
      %1178 = vmatpush.msra.mxu0 %v932
      %1179 = vmatpush.msra.mxu0 %v930
      %1180 = vmatpush.msra.mxu0 %v928
      %1181 = vmatpush.msra.mxu0 %v926
      %1182 = vmatmul.f32.gmra.mxu0 %v1101
      %v1183 = vpop.f32.mrf.mxu0
      %v1184 = vadd.f32 %v1164, %v1183
      %1185 = vdwg.mxu0
      %1186 = vmatpush.msra.mxu0 %v861
      %1187 = vmatpush.msra.mxu0 %v859
      %1188 = vmatpush.msra.mxu0 %v857
      %1189 = vmatpush.msra.mxu0 %v855
      %1190 = vmatpush.msra.mxu0 %v853
      %1191 = vmatpush.msra.mxu0 %v851
      %1192 = vmatpush.msra.mxu0 %v849
      %1193 = vmatpush.msra.mxu0 %v847
      %1194 = vmatpush.msra.mxu0 %v845
      %1195 = vmatpush.msra.mxu0 %v843
      %1196 = vmatpush.msra.mxu0 %v841
      %1197 = vmatpush.msra.mxu0 %v839
      %1198 = vmatpush.msra.mxu0 %v837
      %1199 = vmatpush.msra.mxu0 %v835
      %1200 = vmatpush.msra.mxu0 %v833
      %1201 = vmatpush.msra.mxu0 %v831
      %1202 = vmatmul.f32.gmra.mxu0 %v1098
      %v1203 = vpop.f32.mrf.mxu0
      %v1204 = vadd.f32 0.0, %v1203
      %1205 = vdwg.mxu0
      %1206 = vmatpush.msra.mxu0 %v893
      %1207 = vmatpush.msra.mxu0 %v891
      %1208 = vmatpush.msra.mxu0 %v889
      %1209 = vmatpush.msra.mxu0 %v887
      %1210 = vmatpush.msra.mxu0 %v885
      %1211 = vmatpush.msra.mxu0 %v883
      %1212 = vmatpush.msra.mxu0 %v881
      %1213 = vmatpush.msra.mxu0 %v879
      %1214 = vmatpush.msra.mxu0 %v877
      %1215 = vmatpush.msra.mxu0 %v875
      %1216 = vmatpush.msra.mxu0 %v873
      %1217 = vmatpush.msra.mxu0 %v871
      %1218 = vmatpush.msra.mxu0 %v869
      %1219 = vmatpush.msra.mxu0 %v867
      %1220 = vmatpush.msra.mxu0 %v865
      %1221 = vmatpush.msra.mxu0 %v863
      %1222 = vmatmul.f32.gmra.mxu0 %v1099
      %v1223 = vpop.f32.mrf.mxu0
      %v1224 = vadd.f32 %v1204, %v1223
      %1225 = vdwg.mxu0
      %1226 = vmatpush.msra.mxu0 %v925
      %1227 = vmatpush.msra.mxu0 %v923
      %1228 = vmatpush.msra.mxu0 %v921
      %1229 = vmatpush.msra.mxu0 %v919
      %1230 = vmatpush.msra.mxu0 %v917
      %1231 = vmatpush.msra.mxu0 %v915
      %1232 = vmatpush.msra.mxu0 %v913
      %1233 = vmatpush.msra.mxu0 %v911
      %1234 = vmatpush.msra.mxu0 %v909
      %1235 = vmatpush.msra.mxu0 %v907
      %1236 = vmatpush.msra.mxu0 %v905
      %1237 = vmatpush.msra.mxu0 %v903
      %1238 = vmatpush.msra.mxu0 %v901
      %1239 = vmatpush.msra.mxu0 %v899
      %1240 = vmatpush.msra.mxu0 %v897
      %1241 = vmatpush.msra.mxu0 %v895
      %1242 = vmatmul.f32.gmra.mxu0 %v1100
      %v1243 = vpop.f32.mrf.mxu0
      %v1244 = vadd.f32 %v1224, %v1243
      %1245 = vdwg.mxu0
      %1246 = vmatpush.msra.mxu0 %v957
      %1247 = vmatpush.msra.mxu0 %v955
      %1248 = vmatpush.msra.mxu0 %v953
      %1249 = vmatpush.msra.mxu0 %v951
      %1250 = vmatpush.msra.mxu0 %v949
      %1251 = vmatpush.msra.mxu0 %v947
      %1252 = vmatpush.msra.mxu0 %v945
      %1253 = vmatpush.msra.mxu0 %v943
      %1254 = vmatpush.msra.mxu0 %v941
      %1255 = vmatpush.msra.mxu0 %v939
      %1256 = vmatpush.msra.mxu0 %v937
      %1257 = vmatpush.msra.mxu0 %v935
      %1258 = vmatpush.msra.mxu0 %v933
      %1259 = vmatpush.msra.mxu0 %v931
      %1260 = vmatpush.msra.mxu0 %v929
      %1261 = vmatpush.msra.mxu0 %v927
      %1262 = vmatmul.f32.gmra.mxu0 %v1101
      %v1263 = vpop.f32.mrf.mxu0
      %v1264 = vadd.f32 %v1244, %v1263
      %1265 = vdwg.mxu0
      %v1266 = vmul.f32 %v1029, %v1184
      %v1267 = vmul.f32 %v1089, %v1264
      %vm1268 = vcmask 1043456
      %v1269 = vsel %vm1268, %v1266, 0.0
      %v1270 = vrot.slane %v1269, 4
      %v1271 = vadd.f32 %v1269, %v1270
      %v1272 = vrot.slane %v1271, 2
      %v1273 = vadd.f32 %v1271, %v1272
      %v1274 = vrot.slane %v1273, 1
      %v1275 = vadd.f32 %v1273, %v1274
      %v1276 = vsel %vm1268, %v1267, 0.0
      %v1277 = vrot.slane %v1276, 4
      %v1278 = vadd.f32 %v1276, %v1277
      %v1279 = vrot.slane %v1278, 2
      %v1280 = vadd.f32 %v1278, %v1279
      %v1281 = vrot.slane %v1280, 1
      %v1282 = vadd.f32 %v1280, %v1281
      %v1285 = vrot.slane %v1282, 7
      %vm1286 = vcmask 1040384
      %v1287 = vsel %vm1286, %v1275, %v1285
      %v1289 = vlaneseq
      %vm1290 = vcmp.ge.s32.totalorder %v1289, 0
      %vm1291 = vcmp.lt.s32.totalorder %v1289, 256
      %vm1292 = vmand %vm1290, %vm1291
      %1293 = vst.msk [vmem:[%s213] sm:$0x3] %vm1292, %v1287
      %s1294 = smul.u32 2, %s15
      %p1295 = scmp.lt.s32.totalorder %s1294, 3
      %s1296 = scalar_select %p1295, %s1294, 3
      %s1297 = scalar_lea.vmem %s4, %s1296
      // Predicated region
      $region37: #{mf_forward_pallas.1} parent=35 // pred_check
        %p1298 = pneg %p127
      $region38: #{mf_forward_pallas.1} parent=35 // pred_check_branch
        %1300 = sbr.rel (%p1298) target = $region40
      $region39: #{mf_forward_pallas.1} parent=35 // pred_region
        %s1301 = smul.u32 2, %s15
      $region40: #{mf_forward_pallas.1} parent=35 // pred_fallthru
        _
    $region36: #{mf_forward_pallas.1} parent=5 // pred_fallthru
      _
    %p1302 = scmp.le.s32.totalorder 2, %s10
    // Predicated region
    $region41: #{mf_forward_pallas.1} parent=5 // pred_check
      %p1303 = pneg %p1302
    $region42: #{mf_forward_pallas.1} parent=5 // pred_check_branch
      %1305 = sbr.rel (%p1303) target = $region44
    $region43: #{mf_forward_pallas.1} parent=5 // pred_region
      %s1306 = ssub.s32 %s10, 2
      // Predicated region
      $region45: #{mf_forward_pallas.1} parent=43 // pred_check
        %p1307 = pneg %p133
      $region46: #{mf_forward_pallas.1} parent=43 // pred_check_branch
        %1309 = sbr.rel (%p1307) target = $region48
      $region47: #{mf_forward_pallas.1} parent=43 // pred_region
        %s1310 = smul.u32 2, %s16
        %p1311 = scmp.lt.s32.totalorder %s1310, 3
        %s1312 = scalar_select %p1311, %s1310, 3
        %s1313 = scalar_lea.vmem %s4, %s1312
      $region48: #{mf_forward_pallas.1} parent=43 // pred_fallthru
        _
    $region44: #{mf_forward_pallas.1} parent=5 // pred_fallthru
      _
  $region6: #{mf_forward_pallas.1} parent=0 // loop_footer
    %s14 = sadd.s32 1, %s10
  $region7: #{mf_forward_pallas.1} parent=0 // loop_footer_branch
    %9 = sbr.rel target = $region3
  $region8: #{mf_forward_pallas.1} parent=0 // loop_exit
    _

</llo_original>
